<compile_context>
chip_gen: v7x
topology: tpu7x:2x2x1
jax: 0.10.0
libtpu: 0.0.40
codegen_flags: <defaults>
</compile_context>

<pallas_src>
import functools
import math

import jax
import jax.numpy as jnp
from jax.experimental import pallas as pl
from jax.experimental.pallas import tpu as pltpu


def _eca_kernel(w_ref, x_ref, o_ref, *, kernel_size: int, inv_hw: float):
    """One batch element, spatial dims pre-flattened.

    w_ref : SMEM (k,) f32            -- Conv1d(1, 1, k, bias=False) weights
    x_ref : VMEM (C, HW) native dt   -- input slab (lane-dense: HW on lanes)
    o_ref : VMEM (C, HW) native dt   -- output slab
    """
    pad = (kernel_size - 1) // 2
    x = x_ref[...]                               # native dtype, no full-slab upcast
    C = x.shape[0]

    # --- global average pool: one lane-axis reduce + scalar scale (f32) ------
    pooled = (jnp.sum(x, axis=-1, keepdims=True).astype(jnp.float32)
              * jnp.float32(inv_hw))                          # (C, 1) f32

    # --- 1D cross-correlation along channels, zero padding -------------------
    # Operand is a tiny (C + 2*pad, 1) f32 vector, so the pad/slice copies are
    # negligible.  A pltpu.roll-based shifted-tap formulation was deliberately
    # avoided: sublane rotates of non-8-aligned channel counts are not robustly
    # supported, and this path is far off the memory-bound critical path.
    if pad > 0:
        zeros = jnp.zeros((pad, 1), jnp.float32)
        padded = jnp.concatenate([zeros, pooled, zeros], axis=0)   # (C+2p, 1)
    else:
        padded = pooled
    acc = jnp.zeros((C, 1), jnp.float32)
    for j in range(kernel_size):                 # k is tiny -> static unroll
        acc = acc + w_ref[j] * padded[j:j + C, :]

    # --- sigmoid gate (EUP) and channel-wise rescale in native dtype ---------
    attn = jax.nn.sigmoid(acc)                   # (C, 1) f32
    o_ref[...] = (x * attn.astype(x.dtype)).astype(o_ref.dtype)


def eca_nd(x: jax.Array, weight: jax.Array) -> jax.Array:
    """ECA forward.  x: (N, C, *spatial) NCHW-style; weight: (k,) or (1,1,k)."""
    w = weight.reshape(-1).astype(jnp.float32)
    k = int(w.shape[0])
    assert k % 2 == 1, "ECA kernel_size must be odd (padding=(k-1)//2)"

    N, C = x.shape[0], x.shape[1]
    hw = math.prod(x.shape[2:])
    x2 = x.reshape(N, C, hw)                     # lane-dense flattened spatial

    # VMEM budget: input + output slabs, double-buffered by the pipeline.
    slab_bytes = C * hw * x2.dtype.itemsize
    vmem_needed = 4 * slab_bytes + (2 << 20)
    vmem_limit = int(min(96 << 20, max(32 << 20, vmem_needed)))
    # TODO(synk): for slabs whose 4x footprint exceeds ~56 MiB (v7x's 64 MiB
    # VMEM), switch to a two-pass spatially-tiled pool+scale design (and use a
    # second parallel grid axis over spatial tiles for small-batch v7x).

    kernel = functools.partial(_eca_kernel, kernel_size=k, inv_hw=1.0 / hw)
    slab_spec = pl.BlockSpec((None, C, hw), lambda n: (n, 0, 0))  # batch squeezed

    cost = pl.CostEstimate(
        flops=2 * x2.size + 2 * N * C * k,       # pool adds + scale muls + conv
        transcendentals=N * C,                   # sigmoid
        bytes_accessed=2 * x2.size * x2.dtype.itemsize + w.size * 4,
    )

    out2 = pl.pallas_call(
        kernel,
        out_shape=jax.ShapeDtypeStruct(x2.shape, x.dtype),
        grid=(N,),
        in_specs=[
            pl.BlockSpec(memory_space=pltpu.MemorySpace.SMEM),    # conv weights
            slab_spec,                                            # x slab
        ],
        out_specs=slab_spec,
        compiler_params=pltpu.CompilerParams(
            dimension_semantics=("parallel",),
            vmem_limit_bytes=vmem_limit),
        cost_estimate=cost,
    )(w, x2)
    return out2.reshape(x.shape)


def eca_ref(x, w):
    """Pure-JAX reference mirroring the PyTorch forward (dim=2, NCHW)."""
    C = x.shape[1]
    k = w.shape[0]
    pad = (k - 1) // 2
    y = jnp.mean(x, axis=tuple(range(2, x.ndim)))          # (N, C)
    yp = jnp.pad(y, ((0, 0), (pad, pad)))
    conv = sum(w[j] * yp[:, j:j + C] for j in range(k))    # cross-correlation
    attn = jax.nn.sigmoid(conv)                            # (N, C)
    return x * attn.reshape(attn.shape + (1,) * (x.ndim - 2))


if __name__ == "__main__":
    key = jax.random.PRNGKey(0)
    kx, kw = jax.random.split(key)

    # channels=4, kernel_size=3, dim=2  -> input (N, C, H, W)
    N, C, H, W = 2, 4, 16, 16
    kernel_size = 3

    x = jax.random.normal(kx, (N, C, H, W), dtype=jnp.float32)
    # Deterministic init mimicking torch Conv1d default (uniform, fan_in = k).
    bound = 1.0 / (kernel_size ** 0.5)
    weight = jax.random.uniform(kw, (kernel_size,), jnp.float32, -bound, bound)

    out = eca_nd(x, weight)
    out = jax.block_until_ready(out)

    ref = eca_ref(x, weight)
    assert out.shape == x.shape and out.dtype == x.dtype
    assert jnp.allclose(out, ref, atol=1e-5, rtol=1e-5), "Pallas/JAX mismatch"
    print("KERNEL_OK")
</pallas_src>

<mosaic_0001>
module attributes {stable_mosaic.version = 11 : i64} {
  func.func @_eca_kernel(%arg0: i32, %arg1: memref<3xf32, #tpu.memory_space<smem>>, %arg2: memref<1x4x256xf32, #tpu.memory_space<vmem>>, %arg3: memref<1x4x256xf32, #tpu.memory_space<vmem>>) attributes {dimension_semantics = [#tpu.dimension_semantics<parallel>], iteration_bounds = array<i64: 2>, scalar_prefetch = 0 : i64, scratch_operands = 0 : i64, tpu.core_type = #tpu.core_type<tc>, window_params = [{transform_indices = @transform_0, window_bounds = array<i64: 3>}, {transform_indices = @transform_1, window_bounds = array<i64: 1, 4, 256>}, {transform_indices = @transform_2, window_bounds = array<i64: 1, 4, 256>}]} {
    %c0 = arith.constant 0 : index
    %c0_0 = arith.constant 0 : index
    %c0_1 = arith.constant 0 : index
    %0 = vector.load %arg2[%c0, %c0_0, %c0_1] : memref<1x4x256xf32, #tpu.memory_space<vmem>>, vector<1x4x256xf32>
    %1 = vector.shape_cast %0 : vector<1x4x256xf32> to vector<4x256xf32>
    %cst = arith.constant dense<0.000000e+00> : vector<4xf32>
    %2 = vector.multi_reduction <add>, %1, %cst [1] : vector<4x256xf32> to vector<4xf32>
    %3 = vector.shape_cast %2 : vector<4xf32> to vector<4x1xf32>
    %cst_2 = arith.constant 3.906250e-03 : f32
    %4 = vector.broadcast %cst_2 : f32 to vector<4x1xf32>
    %5 = arith.mulf %3, %4 : vector<4x1xf32>
    %cst_3 = arith.constant 0.000000e+00 : f32
    %6 = vector.broadcast %cst_3 : f32 to vector<1x1xf32>
    %7 = tpu.concatenate %6, %5, %6 in 0 : vector<1x1xf32>, vector<4x1xf32>, vector<1x1xf32> -> vector<6x1xf32>
    %cst_4 = arith.constant 0.000000e+00 : f32
    %8 = vector.broadcast %cst_4 : f32 to vector<4x1xf32>
    %c0_5 = arith.constant 0 : index
    %9 = memref.load %arg1[%c0_5] : memref<3xf32, #tpu.memory_space<smem>>
    %10 = vector.extract_strided_slice %7 {offsets = [0, 0], sizes = [4, 1], strides = [1, 1]} : vector<6x1xf32> to vector<4x1xf32>
    %11 = vector.broadcast %9 : f32 to vector<4x1xf32>
    %12 = arith.mulf %11, %10 : vector<4x1xf32>
    %13 = arith.addf %8, %12 : vector<4x1xf32>
    %c1 = arith.constant 1 : index
    %14 = memref.load %arg1[%c1] : memref<3xf32, #tpu.memory_space<smem>>
    %15 = vector.extract_strided_slice %7 {offsets = [1, 0], sizes = [4, 1], strides = [1, 1]} : vector<6x1xf32> to vector<4x1xf32>
    %16 = vector.broadcast %14 : f32 to vector<4x1xf32>
    %17 = arith.mulf %16, %15 : vector<4x1xf32>
    %18 = arith.addf %13, %17 : vector<4x1xf32>
    %c2 = arith.constant 2 : index
    %19 = memref.load %arg1[%c2] : memref<3xf32, #tpu.memory_space<smem>>
    %20 = vector.extract_strided_slice %7 {offsets = [2, 0], sizes = [4, 1], strides = [1, 1]} : vector<6x1xf32> to vector<4x1xf32>
    %21 = vector.broadcast %19 : f32 to vector<4x1xf32>
    %22 = arith.mulf %21, %20 : vector<4x1xf32>
    %23 = arith.addf %18, %22 : vector<4x1xf32>
    %24 = arith.negf %23 : vector<4x1xf32>
    %25 = math.exp %24 : vector<4x1xf32>
    %cst_6 = arith.constant 1.000000e+00 : f32
    %26 = vector.broadcast %cst_6 : f32 to vector<4x1xf32>
    %27 = arith.addf %26, %25 : vector<4x1xf32>
    %28 = arith.divf %26, %27 : vector<4x1xf32>
    %29 = vector.broadcast %28 : vector<4x1xf32> to vector<4x256xf32>
    %30 = arith.mulf %1, %29 : vector<4x256xf32>
    %c0_7 = arith.constant 0 : index
    %c0_8 = arith.constant 0 : index
    %c0_9 = arith.constant 0 : index
    %31 = vector.load %arg3[%c0_7, %c0_8, %c0_9] : memref<1x4x256xf32, #tpu.memory_space<vmem>>, vector<1x4x256xf32>
    %32 = vector.shape_cast %31 : vector<1x4x256xf32> to vector<4x256xf32>
    %33 = vector.shape_cast %30 : vector<4x256xf32> to vector<1x4x256xf32>
    tpu.vector_store %arg3[%c0_7, %c0_8, %c0_9], %33 {strides = array<i32>} : memref<1x4x256xf32, #tpu.memory_space<vmem>>, vector<1x4x256xf32>,
    return
  }
  func.func @transform_0(%arg0: i32) -> i32 {
    %c0_i32 = arith.constant 0 : i32
    %c0_i32_0 = arith.constant 0 : i32
    return %c0_i32 : i32
  }
  func.func @transform_1(%arg0: i32) -> (i32, i32, i32) {
    %c0_i32 = arith.constant 0 : i32
    %c0_i32_0 = arith.constant 0 : i32
    %c0_i32_1 = arith.constant 0 : i32
    return %arg0, %c0_i32, %c0_i32_0 : i32, i32, i32
  }
  func.func @transform_2(%arg0: i32) -> (i32, i32, i32) {
    %c0_i32 = arith.constant 0 : i32
    %c0_i32_0 = arith.constant 0 : i32
    %c0_i32_1 = arith.constant 0 : i32
    return %arg0, %c0_i32, %c0_i32_0 : i32, i32, i32
  }
}

</mosaic_0001>

<llo_original>
// kernel: tpu_custom_call.1
$region0: #{tpu_custom_call.1}
  #allocation0 [shape = 'u32[]', space=smem, size = 0x4, offset = 0x4, fixed_abs, tag = 'smem constant byte address 0x4 - core index']
  #allocation1 [shape = 'u32[144,128]{1,0:T(1,128)}', space=vmem, size = 0x12000, scoped, tag = 'internal scratch']
  %s0 = inlined_call_operand.hbm [shape: f32[3], index: 0, kind: input, shape index: {}]
  %s1 = inlined_call_operand.hbm [shape: f32[2,4,256], index: 1, kind: input, shape index: {}]
  %s2 = inlined_call_operand.hbm [shape: f32[2,4,256], index: 2, kind: output, shape index: {}]
  %s3 = sld [smem:[#allocation0]]
  $region49: #{tpu_custom_call.1} parent=0
    _
  %s5 = ssub.s32 1, %s3
  %s6 = scalar_select 0, %s5, %s3
  $region1: #{tpu_custom_call.1} parent=0
    #allocation2 [shape = 'u8[512]{0}', space=smem, size = 0x200, scoped, tag = 'input window, operand 0, single buffered']
    #allocation3 [shape = 's32[2]{0}', space=sflag, size = 0x8, scoped, tag = 'scoped memory for tpu_custom_call.1']
    #allocation4 [shape = 's32[2]{0}', space=sflag, size = 0x8, scoped, tag = 'scoped memory for tpu_custom_call.1']
    #allocation5 [shape = 's32[2]{0}', space=sflag, size = 0x8, scoped, tag = 'scoped memory for tpu_custom_call.1']
    #allocation6 [shape = 'u8[8192]{0}', space=vmem, size = 0x2000, scoped, tag = 'input window, operand 1']
    #allocation7 [shape = 'u8[8192]{0}', space=vmem, size = 0x2000, scoped, tag = 'output window, operand 0']
    %7 = vsyncpa [#allocation5], 0
    %8 = vsyncpa [#allocation3], 0
    %s9 = scalar_lea.sflag [#allocation3], 1
    %10 = vsyncpa %s9, 0
    %11 = vsyncpa [#allocation4], 0
    %s12 = scalar_lea.sflag [#allocation4], 1
    %13 = vsyncpa %s12, 0
    loop: start=0, step=1, limit=4
    $region2: #{tpu_custom_call.1} parent=1 // loop_pre_header
      _
    $region3: #{tpu_custom_call.1} parent=1 // loop_header
      %s15 = sphi 0, %s19
      %p16 = scmp.ge.s32.totalorder %s15, 4
      %s23 = sphi 0, %s23
      %s25 = sphi 0, %s23
      %s26 = sphi 0, %s25
      %s40 = sphi 0, %s26
      %s46 = sphi 0, %s48
      %s49 = sphi 0, %s46
      %s50 = sphi 0, %s49
      %s66 = sphi 0, %s50
      %s72 = sphi 0, %s74
      %s75 = sphi 0, %s72
      %s76 = sphi 0, %s75
      %s92 = sphi 0, %s76
    $region4: #{tpu_custom_call.1} parent=1 // loop_header_branch
      %18 = sbr.rel (%p16) target = $region8
    $region5: #{tpu_custom_call.1} parent=1 // loop_body
      %s20 = ssub.s32 %s15, 1
      %s21 = ssub.s32 %s15, 2
      %s22 = sadd.s32 %s15, 1
      %s24 = sadd.s32 %s23, 1
      %p27 = scmp.eq.s32.totalorder %s15, 1
      %p28 = scmp.ne.s32.totalorder %s23, %s25
      %p29 = scmp.eq.s32.totalorder %s15, 0
      %p30 = por %p28, %p29
      %p31 = scmp.ne.s32.totalorder %s23, %s25
      %p32 = scmp.eq.s32.totalorder %s20, 1
      %p33 = por %p31, %p32
      %p34 = scmp.ne.s32.totalorder %s25, %s26
      %p35 = scmp.eq.s32.totalorder %s20, 0
      %p36 = por %p34, %p35
      %p37 = scmp.ne.s32.totalorder %s25, %s26
      %p38 = scmp.eq.s32.totalorder %s21, 1
      %p39 = por %p37, %p38
      %p41 = scmp.ne.s32.totalorder %s26, %s40
      %p42 = scmp.eq.s32.totalorder %s21, 0
      %p43 = por %p41, %p42
      %s44 = ssub.s32 %s15, %s22
      %p45 = scmp.eq.s32.totalorder %s44, 0
      %s47 = sadd.s32 %s46, 1
      %s48 = scalar_select %p45, %s46, %s47
      %p51 = pneg %p45
      %p52 = scmp.eq.s32.totalorder %s15, 1
      %p53 = por %p51, %p52
      %p54 = scmp.ne.s32.totalorder %s46, %s49
      %p55 = scmp.eq.s32.totalorder %s15, 0
      %p56 = por %p54, %p55
      %p57 = scmp.ne.s32.totalorder %s46, %s49
      %p58 = scmp.eq.s32.totalorder %s20, 1
      %p59 = por %p57, %p58
      %p60 = scmp.ne.s32.totalorder %s49, %s50
      %p61 = scmp.eq.s32.totalorder %s20, 0
      %p62 = por %p60, %p61
      %p63 = scmp.ne.s32.totalorder %s49, %s50
      %p64 = scmp.eq.s32.totalorder %s21, 1
      %p65 = por %p63, %p64
      %p67 = scmp.ne.s32.totalorder %s50, %s66
      %p68 = scmp.eq.s32.totalorder %s21, 0
      %p69 = por %p67, %p68
      %s70 = ssub.s32 %s15, %s22
      %p71 = scmp.eq.s32.totalorder %s70, 0
      %s73 = sadd.s32 %s72, 1
      %s74 = scalar_select %p71, %s72, %s73
      %p77 = pneg %p71
      %p78 = scmp.eq.s32.totalorder %s15, 1
      %p79 = por %p77, %p78
      %p80 = scmp.ne.s32.totalorder %s72, %s75
      %p81 = scmp.eq.s32.totalorder %s15, 0
      %p82 = por %p80, %p81
      %p83 = scmp.ne.s32.totalorder %s72, %s75
      %p84 = scmp.eq.s32.totalorder %s20, 1
      %p85 = por %p83, %p84
      %p86 = scmp.ne.s32.totalorder %s75, %s76
      %p87 = scmp.eq.s32.totalorder %s20, 0
      %p88 = por %p86, %p87
      %p89 = scmp.ne.s32.totalorder %s75, %s76
      %p90 = scmp.eq.s32.totalorder %s21, 1
      %p91 = por %p89, %p90
      %p93 = scmp.ne.s32.totalorder %s76, %s92
      %p94 = scmp.eq.s32.totalorder %s21, 0
      %p95 = por %p93, %p94
      %p96 = scmp.le.s32.totalorder 1, %s15
      %p97 = scmp.lt.s32.totalorder %s15, 3
      %p98 = pnand %p96, %p97
      %p99 = pneg %p98
      // Predicated region
      $region9: #{tpu_custom_call.1} parent=5 // pred_check
        _
      $region10: #{tpu_custom_call.1} parent=5 // pred_check_branch
        %101 = sbr.rel (%p98) target = $region12
      $region11: #{tpu_custom_call.1} parent=5 // pred_region
        %s102 = ssub.s32 %s15, 1
        // Predicated region
        $region13: #{tpu_custom_call.1} parent=11 // pred_check
          %p103 = pneg %p36
        $region14: #{tpu_custom_call.1} parent=11 // pred_check_branch
          %105 = sbr.rel (%p103) target = $region16
        $region15: #{tpu_custom_call.1} parent=11 // pred_region
          %s107 = ssub.s32 16, 16
          %108 = vsyncadd [#allocation5], %s107
          %111 = dma.hbm_to_smem %s0, 16, [#allocation2], [#allocation5]
        $region16: #{tpu_custom_call.1} parent=11 // pred_fallthru
          _
      $region12: #{tpu_custom_call.1} parent=5 // pred_fallthru
        _
      %p112 = scmp.lt.s32.totalorder %s15, 2
      // Predicated region
      $region17: #{tpu_custom_call.1} parent=5 // pred_check
        %p113 = pneg %p112
      $region18: #{tpu_custom_call.1} parent=5 // pred_check_branch
        %115 = sbr.rel (%p113) target = $region20
      $region19: #{tpu_custom_call.1} parent=5 // pred_region
        // Predicated region
        $region21: #{tpu_custom_call.1} parent=19 // pred_check
          %p116 = pneg %p56
        $region22: #{tpu_custom_call.1} parent=19 // pred_check_branch
          %118 = sbr.rel (%p116) target = $region24
        $region23: #{tpu_custom_call.1} parent=19 // pred_region
          %s119 = sand.u32 %s46, 1
          %s120 = scalar_lea.sflag [#allocation3], %s119
          %s121 = sand.u32 %s46, 1
          %s122 = smul.addr %s121, 8
          %s123 = scalar_lea.vmem [#allocation6], %s122
          %s125 = ssub.s32 128, 128
          %126 = vsyncadd %s120, %s125
          %s127 = smul.addr %s15, 2
          %s128 = smul.addr %s127, 64
          %s129 = scalar_lea.hbm %s1, %s128
          %s131 = sshll.u32 %s123, 4
          %s132 = int_to_ptr.vmem [resolvable:$true] %s131
          %134 = dma.hbm_to_vmem [thread:$0]  %s129, 128, %s132, %s120
        $region24: #{tpu_custom_call.1} parent=19 // pred_fallthru
          _
      $region20: #{tpu_custom_call.1} parent=5 // pred_fallthru
        _
      %p135 = scmp.le.s32.totalorder 1, %s15
      %p136 = scmp.lt.s32.totalorder %s15, 3
      %p137 = pnand %p135, %p136
      %p138 = pneg %p137
      // Predicated region
      $region25: #{tpu_custom_call.1} parent=5 // pred_check
        _
      $region26: #{tpu_custom_call.1} parent=5 // pred_check_branch
        %140 = sbr.rel (%p137) target = $region28
      $region27: #{tpu_custom_call.1} parent=5 // pred_region
        %s141 = ssub.s32 %s15, 1
        // Predicated region
        $region29: #{tpu_custom_call.1} parent=27 // pred_check
          %p142 = pneg %p36
        $region30: #{tpu_custom_call.1} parent=27 // pred_check_branch
          %144 = sbr.rel (%p142) target = $region32
        $region31: #{tpu_custom_call.1} parent=27 // pred_region
          %145 = dma.done [#allocation5], 16
        $region32: #{tpu_custom_call.1} parent=27 // pred_fallthru
          _
        %s146 = sand.u32 %s49, 1
        %s147 = scalar_lea.sflag [#allocation3], %s146
        %s148 = sand.u32 %s49, 1
        %s149 = smul.addr %s148, 8
        %s150 = scalar_lea.vmem [#allocation6], %s149
        // Predicated region
        $region33: #{tpu_custom_call.1} parent=27 // pred_check
          %p151 = pneg %p62
        $region34: #{tpu_custom_call.1} parent=27 // pred_check_branch
          %153 = sbr.rel (%p151) target = $region36
        $region35: #{tpu_custom_call.1} parent=27 // pred_region
          %154 = dma.done %s147, 128
        $region36: #{tpu_custom_call.1} parent=27 // pred_fallthru
          _
        %155 = sfence
        %p156 = pneg %p36
        %p157 = pneg %p33
        %s158 = sand.u32 %s49, 1
        %s159 = scalar_lea.sflag [#allocation3], %s158
        %s160 = sand.u32 %s49, 1
        %s161 = smul.addr %s160, 8
        %s162 = scalar_lea.vmem [#allocation6], %s161
        %p163 = pneg %p62
        %p164 = pneg %p59
        %p165 = pneg %p88
        %p166 = pneg %p85
        %s167 = sand.u32 %s75, 1
        %s168 = scalar_lea.sflag [#allocation4], %s167
        %s169 = sand.u32 %s75, 1
        %s170 = smul.addr %s169, 8
        %s171 = scalar_lea.vmem [#allocation7], %s170
        %v172 = vld [vmem:[%s150] sm:$0xff]
        %v174 = vcombine.high %v172, %v172
        %vm176 = vcmask 1043456
        %v177 = vsel %vm176, %v172, 0.0
        %v178 = vsel %vm176, %v174, 0.0
        %v179 = vadd.f32 %v177, %v178
        %180 = vadd.xlane.f32.xlu0 %v179
        %v181 = vpop.xlane.xlu0 %180
        %v182 = vmul.f32 %v181, 0.00390625
        %v184 = vrot.slane %v182, 7
        %vm186 = vcmask 1040384
        %v187 = vsel %vm186, 0.0, %v184
        %vm188 = vcmask 1044480
        %v189 = vsel %vm188, %v187, 0.0
        %s190 = sld [smem:[#allocation2]]
        %v191 = vstv %s190
        %v192 = vmul.f32 %v191, %v189
        %v193 = vadd.f32 %v192, 0.0
        %s194 = sld [smem:[#allocation2 + $0x1]]
        %v195 = vstv %s194
        %v196 = vmul.f32 %v195, %v189
        %v198 = vrot.slane %v196, 1
        %v200 = vadd.f32 %v193, %v198
        %s201 = sld [smem:[#allocation2 + $0x2]]
        %v202 = vstv %s201
        %v203 = vmul.f32 %v202, %v189
        %v205 = vrot.slane %v203, 2
        %v207 = vadd.f32 %v200, %v205
        %v208 = vxor.u32 %v207, 2147483648
        %v209 = vmul.f32 %v208, 1.442695
        %v210 = vpow.pop %v209
        %v211 = vadd.f32 %v210, 1.0
        %v212 = vrcp.pop %v211
        %v213 = vmul.f32 1.0, %v212
        %215 = vset.pattern.permute.xlu0 0
        %216 = vperm.xlu0 %215, %v213
        %v217 = vpop.permute.xlu0 %216
        %v219 = vunpack.c.l.s4 839922192
        %v220 = vunpack.c.0.s8 %v219
        %v221 = vlaneseq
        %v222 = vshrl.u32 %v221, 7
        %v223 = vsub.s32 %v220, %v222
        %v224 = vrot.slane %v217, %v223
        %v226 = vmul.f32 %v172, %v224
        %227 = vst [vmem:[%s171] sm:$0xff] %v226
        %s228 = sand.u32 %s75, 1
        %s229 = scalar_lea.sflag [#allocation4], %s228
        %s230 = sand.u32 %s75, 1
        %s231 = smul.addr %s230, 8
        %s232 = scalar_lea.vmem [#allocation7], %s231
        // Predicated region
        $region37: #{tpu_custom_call.1} parent=27 // pred_check
          %p233 = pneg %p85
        $region38: #{tpu_custom_call.1} parent=27 // pred_check_branch
          %235 = sbr.rel (%p233) target = $region40
        $region39: #{tpu_custom_call.1} parent=27 // pred_region
          %s237 = ssub.s32 128, 128
          %238 = vsyncadd %s229, %s237
          %s239 = smul.addr %s20, 2
          %s240 = smul.addr %s239, 64
          %s241 = scalar_lea.hbm %s2, %s240
          %s243 = sshll.u32 %s232, 4
          %s244 = int_to_ptr.vmem [resolvable:$true] %s243
          %246 = dma.vmem_to_hbm [thread:$0]  %s244, 128, %s241, %s229
        $region40: #{tpu_custom_call.1} parent=27 // pred_fallthru
          _
      $region28: #{tpu_custom_call.1} parent=5 // pred_fallthru
        _
      %p247 = scmp.le.s32.totalorder 2, %s15
      // Predicated region
      $region41: #{tpu_custom_call.1} parent=5 // pred_check
        %p248 = pneg %p247
      $region42: #{tpu_custom_call.1} parent=5 // pred_check_branch
        %250 = sbr.rel (%p248) target = $region44
      $region43: #{tpu_custom_call.1} parent=5 // pred_region
        %s251 = ssub.s32 %s15, 2
        // Predicated region
        $region45: #{tpu_custom_call.1} parent=43 // pred_check
          %p252 = pneg %p91
        $region46: #{tpu_custom_call.1} parent=43 // pred_check_branch
          %254 = sbr.rel (%p252) target = $region48
        $region47: #{tpu_custom_call.1} parent=43 // pred_region
          %s255 = sand.u32 %s76, 1
          %s256 = scalar_lea.sflag [#allocation4], %s255
          %s257 = sand.u32 %s76, 1
          %s258 = smul.addr %s257, 8
          %s259 = scalar_lea.vmem [#allocation7], %s258
          %260 = dma.done %s256, 128
        $region48: #{tpu_custom_call.1} parent=43 // pred_fallthru
          _
      $region44: #{tpu_custom_call.1} parent=5 // pred_fallthru
        _
    $region6: #{tpu_custom_call.1} parent=1 // loop_footer
      %s19 = sadd.s32 1, %s15
    $region7: #{tpu_custom_call.1} parent=1 // loop_footer_branch
      %14 = sbr.rel target = $region3
    $region8: #{tpu_custom_call.1} parent=1 // loop_exit
      _
    %261 = vsyncpa [#allocation3], 1
    %s262 = scalar_lea.sflag [#allocation3], 1
    %263 = vsyncpa %s262, 1
    %264 = vsyncpa [#allocation4], 1
    %s265 = scalar_lea.sflag [#allocation4], 1
    %266 = vsyncpa %s265, 1
    %267 = vsyncpa [#allocation5], 1
    %s268 = scalar_lea.sflag [#allocation5], 1
    %269 = vsyncpa %s268, 1

</llo_original>
